<compile_context>
chip_gen: v7x
topology: tpu7x:2x2x1
jax: 0.10.0
libtpu: 0.0.40
codegen_flags: <defaults>
</compile_context>

<pallas_src>
import functools

import jax
import jax.numpy as jnp
from jax.experimental import pallas as pl
from jax.experimental.pallas import tpu as pltpu


def _round_up(x, m):
    return ((x + m - 1) // m) * m


def make_qnet_forward(state_dim, hidden_dim, action_dim, batch_tile=256):
    """Builds (pack_params, forward) for a fixed Qnet geometry.

    Weight layout is (in_features, out_features), i.e. the transpose of
    torch.nn.Linear.weight; the math (x @ W + b) is identical.
    """
    K1 = _round_up(state_dim + 1, 8)                    # fc1 contraction (x + ones col)
    W = max(_round_up(hidden_dim, 128), _round_up(action_dim, 128))  # lane width
    P_ROWS = K1 + W + 8                                  # w1|b1 block + w2 block + b2 row
    assert batch_tile % 8 == 0

    def pack_params(w1, b1, w2, b2):
        """Pack (w1, b1, w2, b2) into one zero-padded (P_ROWS, W) f32 slab."""
        slab = jnp.zeros((P_ROWS, W), jnp.float32)
        slab = slab.at[:state_dim, :hidden_dim].set(w1.astype(jnp.float32))
        slab = slab.at[state_dim, :hidden_dim].set(b1.astype(jnp.float32))   # bias row
        slab = slab.at[K1:K1 + hidden_dim, :action_dim].set(w2.astype(jnp.float32))
        slab = slab.at[K1 + W, :action_dim].set(b2.astype(jnp.float32))
        return slab

    def qnet_kernel(x_ref, p_ref, out_ref):
        # fc1 (bias folded in via the ones column of x): (TB, K1) @ (K1, W)
        w1 = p_ref[0:K1, :]
        h = jnp.dot(x_ref[...], w1, preferred_element_type=jnp.float32)
        h = jnp.maximum(h, 0.0)                                   # ReLU on the VPU
        # fc2: (TB, W) @ (W, W) + (1, W); pad lanes of w2/b2 are zero.
        w2 = p_ref[K1:K1 + W, :]
        b2 = p_ref[K1 + W:K1 + W + 8, :][0:1, :]                  # aligned 8-row read
        o = jnp.dot(h, w2, preferred_element_type=jnp.float32) + b2
        out_ref[...] = o.astype(out_ref.dtype)                    # full-lane store

    @jax.jit
    def forward(x, params):
        B = x.shape[0]
        B_pad = _round_up(max(B, 8), 8)
        # Pad x to (B_pad, K1): col `state_dim` is the bias-ones column.
        x_pad = jnp.zeros((B_pad, K1), jnp.float32)
        x_pad = x_pad.at[:B, :state_dim].set(x.astype(jnp.float32))
        x_pad = x_pad.at[:, state_dim].set(1.0)

        if B_pad <= batch_tile:
            # Small batch: no grid, whole arrays in VMEM, single invocation.
            out = pl.pallas_call(
                qnet_kernel,
                out_shape=jax.ShapeDtypeStruct((B_pad, W), jnp.float32),
            )(x_pad, params)
        else:
            # Large batch: tile over batch; weights stay resident (block (0,0)).
            tb = batch_tile
            b_grid = _round_up(B_pad, tb)
            if b_grid != B_pad:
                x_pad = jnp.pad(x_pad, ((0, b_grid - B_pad), (0, 0)))
            out = pl.pallas_call(
                qnet_kernel,
                out_shape=jax.ShapeDtypeStruct((b_grid, W), jnp.float32),
                grid=(b_grid // tb,),
                in_specs=[
                    pl.BlockSpec((tb, K1), lambda i: (i, 0)),
                    pl.BlockSpec((P_ROWS, W), lambda i: (0, 0)),
                ],
                out_specs=pl.BlockSpec((tb, W), lambda i: (i, 0)),
                compiler_params=pltpu.CompilerParams(
                    dimension_semantics=("parallel",)),
            )(x_pad, params)

        return out[:B, :action_dim]

    return pack_params, forward


def init_qnet_params(key, state_dim, hidden_dim, action_dim):
    """Deterministic init mimicking torch.nn.Linear (uniform +-1/sqrt(fan_in))."""
    k1, k2, k3, k4 = jax.random.split(key, 4)
    lim1 = 1.0 / jnp.sqrt(state_dim)
    lim2 = 1.0 / jnp.sqrt(hidden_dim)
    w1 = jax.random.uniform(k1, (state_dim, hidden_dim), jnp.float32, -lim1, lim1)
    b1 = jax.random.uniform(k2, (hidden_dim,), jnp.float32, -lim1, lim1)
    w2 = jax.random.uniform(k3, (hidden_dim, action_dim), jnp.float32, -lim2, lim2)
    b2 = jax.random.uniform(k4, (action_dim,), jnp.float32, -lim2, lim2)
    return w1, b1, w2, b2


if __name__ == "__main__":
    # CartPole-v1: state_dim=4, action_dim=2, hidden_dim=128.
    state_dim, hidden_dim, action_dim = 4, 128, 2
    batch = 8

    key = jax.random.PRNGKey(0)
    kx, kp, kx2 = jax.random.split(key, 3)
    x = jax.random.normal(kx, (batch, state_dim), jnp.float32)
    w1, b1, w2, b2 = init_qnet_params(kp, state_dim, hidden_dim, action_dim)

    pack_params, qnet_forward = make_qnet_forward(
        state_dim, hidden_dim, action_dim, batch_tile=256)
    params = pack_params(w1, b1, w2, b2)   # pack once, reuse across calls

    def reference(xx):
        return jnp.maximum(xx @ w1 + b1, 0.0) @ w2 + b2

    # Small-batch (acting) path: single pallas_call, no grid.
    out = qnet_forward(x, params)
    jax.block_until_ready(out)
    assert out.shape == (batch, action_dim)
    assert jnp.allclose(out, reference(x), atol=1e-5, rtol=1e-5)

    # Large-batch (replay minibatch) path: batch-tiled grid, "parallel" axis.
    x_big = jax.random.normal(kx2, (1024, state_dim), jnp.float32)
    out_big = qnet_forward(x_big, params)
    jax.block_until_ready(out_big)
    assert out_big.shape == (1024, action_dim)
    assert jnp.allclose(out_big, reference(x_big), atol=1e-4, rtol=1e-4)

    print("KERNEL_OK")
</pallas_src>

<mosaic_0001>
module attributes {stable_mosaic.version = 11 : i64} {
  func.func @qnet_kernel(%arg0: memref<8x8xf32, #tpu.memory_space<vmem>>, %arg1: memref<144x128xf32, #tpu.memory_space<vmem>>, %arg2: memref<8x128xf32, #tpu.memory_space<vmem>>) attributes {dimension_semantics = [], scalar_prefetch = 0 : i64, scratch_operands = 0 : i64, tpu.core_type = #tpu.core_type<tc>} {
    %c0 = arith.constant 0 : index
    %c0_0 = arith.constant 0 : index
    %0 = vector.load %arg1[%c0, %c0_0] : memref<144x128xf32, #tpu.memory_space<vmem>>, vector<8x128xf32>
    %c0_1 = arith.constant 0 : index
    %c0_2 = arith.constant 0 : index
    %1 = vector.load %arg0[%c0_1, %c0_2] : memref<8x8xf32, #tpu.memory_space<vmem>>, vector<8x8xf32>
    %cst = arith.constant dense<0.000000e+00> : vector<8x128xf32>
    %2 = tpu.matmul %1, %0, %cst {dimension_numbers = #tpu.dot_dimension_numbers<[1], [0], [0], [1], [0, 0, 1, 1], [], []>} : vector<8x8xf32>, vector<8x128xf32>, vector<8x128xf32> -> vector<8x128xf32>
    %cst_3 = arith.constant 0.000000e+00 : f32
    %3 = vector.broadcast %cst_3 : f32 to vector<8x128xf32>
    %4 = arith.maximumf %2, %3 : vector<8x128xf32>
    %c8 = arith.constant 8 : index
    %c0_4 = arith.constant 0 : index
    %5 = vector.load %arg1[%c8, %c0_4] : memref<144x128xf32, #tpu.memory_space<vmem>>, vector<128x128xf32>
    %c136 = arith.constant 136 : index
    %c0_5 = arith.constant 0 : index
    %6 = vector.load %arg1[%c136, %c0_5] : memref<144x128xf32, #tpu.memory_space<vmem>>, vector<8x128xf32>
    %7 = vector.extract_strided_slice %6 {offsets = [0, 0], sizes = [1, 128], strides = [1, 1]} : vector<8x128xf32> to vector<1x128xf32>
    %cst_6 = arith.constant dense<0.000000e+00> : vector<8x128xf32>
    %8 = tpu.matmul %4, %5, %cst_6 {dimension_numbers = #tpu.dot_dimension_numbers<[1], [0], [0], [1], [0, 0, 1, 1], [], []>} : vector<8x128xf32>, vector<128x128xf32>, vector<8x128xf32> -> vector<8x128xf32>
    %9 = vector.broadcast %7 : vector<1x128xf32> to vector<8x128xf32>
    %10 = arith.addf %8, %9 : vector<8x128xf32>
    %c0_7 = arith.constant 0 : index
    %c0_8 = arith.constant 0 : index
    %11 = vector.load %arg2[%c0_7, %c0_8] : memref<8x128xf32, #tpu.memory_space<vmem>>, vector<8x128xf32>
    tpu.vector_store %arg2[%c0_7, %c0_8], %10 {strides = array<i32>} : memref<8x128xf32, #tpu.memory_space<vmem>>, vector<8x128xf32>,
    return
  }
}

</mosaic_0001>

<llo_original>
// kernel: forward.1
$region0: #{forward.1}
  #allocation0 [shape = 'u32[]', space=smem, size = 0x4, offset = 0x4, fixed_abs, tag = 'smem constant byte address 0x4 - core index']
  #allocation1 [shape = 'u32[144,128]{1,0:T(1,128)}', space=vmem, size = 0x12000, scoped, tag = 'internal scratch']
  %s0 = inlined_call_operand.vmem [shape: f32[8,8], index: 0, kind: input, shape index: {}]
  %s1 = inlined_call_operand.hbm [shape: f32[144,128], index: 1, kind: input, shape index: {}]
  %s2 = inlined_call_operand.vmem [shape: f32[8,128], index: 2, kind: output, shape index: {}]
  %s3 = sld [smem:[#allocation0]]
  $region22: #{forward.1} parent=0
    _
  %s5 = ssub.s32 1, %s3
  %s6 = scalar_select 0, %s5, %s3
  $region1: #{forward.1} parent=0
    #allocation2 [shape = 'u8[73728]{0}', space=vmem, size = 0x12000, scoped, tag = 'input window, operand 1, single buffered']
    #allocation3 [shape = 's32[1]{0}', space=sflag, size = 0x4, scoped, tag = 'scoped memory for forward.1']
    %7 = vsyncpa [#allocation3], 0
    // Predicated region
    $region2: #{forward.1} parent=1 // pred_check
      _
    $region3: #{forward.1} parent=1 // pred_check_branch
      %9 = sbr.rel (0) target = $region5
    $region4: #{forward.1} parent=1 // pred_region
      _
    $region5: #{forward.1} parent=1 // pred_fallthru
      _
    // Predicated region
    $region6: #{forward.1} parent=1 // pred_check
      _
    $region7: #{forward.1} parent=1 // pred_check_branch
      %11 = sbr.rel (0) target = $region9
    $region8: #{forward.1} parent=1 // pred_region
      %s13 = ssub.s32 2304, 2304
      %14 = vsyncadd [#allocation3], %s13
      %s15 = sshll.u32 [#allocation2], 4
      %s16 = int_to_ptr.vmem [resolvable:$true] %s15
      %21 = dma.hbm_to_vmem [thread:$0]  %s1, 2304, %s16, [#allocation3], 128, 128, 8
    $region9: #{forward.1} parent=1 // pred_fallthru
      _
    // Predicated region
    $region10: #{forward.1} parent=1 // pred_check
      _
    $region11: #{forward.1} parent=1 // pred_check_branch
      %23 = sbr.rel (0) target = $region13
    $region12: #{forward.1} parent=1 // pred_region
      %24 = dma.done [#allocation3], 2304
    $region13: #{forward.1} parent=1 // pred_fallthru
      _
    %v25 = vld [vmem:[#allocation2] sm:$0xff]
    %v26 = vld [vmem:[%s0] sm:$0xff]
    %vm27 = vcmask 64512
    %v29 = vsel %vm27, %v26, 0
    %31 = vmatprep.subr.mxu0 0.0
    %32 = vmatpush1.msra.mxu0 %v25
    %33 = vmatprep.subr.mxu0 0.0
    %34 = vmatpush1.msra.mxu0 0.0
    %35 = vmatprep.subr.mxu0 0.0
    %36 = vmatpush1.msra.mxu0 0.0
    %37 = vmatprep.subr.mxu0 0.0
    %38 = vmatpush1.msra.mxu0 0.0
    %39 = vmatprep.subr.mxu0 0.0
    %40 = vmatpush1.msra.mxu0 0.0
    %41 = vmatprep.subr.mxu0 0.0
    %42 = vmatpush1.msra.mxu0 0.0
    %43 = vmatprep.subr.mxu0 0.0
    %44 = vmatpush1.msra.mxu0 0.0
    %45 = vmatprep.subr.mxu0 0.0
    %46 = vmatpush1.msra.mxu0 0.0
    %47 = vmatprep.subr.mxu0 0.0
    %48 = vmatpush1.msra.mxu0 0.0
    %49 = vmatprep.subr.mxu0 0.0
    %50 = vmatpush1.msra.mxu0 0.0
    %51 = vmatprep.subr.mxu0 0.0
    %52 = vmatpush1.msra.mxu0 0.0
    %53 = vmatprep.subr.mxu0 0.0
    %54 = vmatpush1.msra.mxu0 0.0
    %55 = vmatprep.subr.mxu0 0.0
    %56 = vmatpush1.msra.mxu0 0.0
    %57 = vmatprep.subr.mxu0 0.0
    %58 = vmatpush1.msra.mxu0 0.0
    %59 = vmatprep.subr.mxu0 0.0
    %60 = vmatpush1.msra.mxu0 0.0
    %61 = vmatprep.subr.mxu0 0.0
    %62 = vmatpush1.msra.mxu0 0.0
    %63 = vmatprep.subr.mxu0 0.0
    %64 = vmatpush1.msra.mxu0 0.0
    %65 = vmatprep.subr.mxu0 0.0
    %66 = vmatpush1.msra.mxu0 0.0
    %67 = vmatprep.subr.mxu0 0.0
    %68 = vmatpush1.msra.mxu0 0.0
    %69 = vmatprep.subr.mxu0 0.0
    %70 = vmatpush1.msra.mxu0 0.0
    %71 = vmatprep.subr.mxu0 0.0
    %72 = vmatpush1.msra.mxu0 0.0
    %73 = vmatprep.subr.mxu0 0.0
    %74 = vmatpush1.msra.mxu0 0.0
    %75 = vmatprep.subr.mxu0 0.0
    %76 = vmatpush1.msra.mxu0 0.0
    %77 = vmatprep.subr.mxu0 0.0
    %78 = vmatpush1.msra.mxu0 0.0
    %79 = vmatprep.subr.mxu0 0.0
    %80 = vmatpush1.msra.mxu0 0.0
    %81 = vmatprep.subr.mxu0 0.0
    %82 = vmatpush1.msra.mxu0 0.0
    %83 = vmatprep.subr.mxu0 0.0
    %84 = vmatpush1.msra.mxu0 0.0
    %85 = vmatprep.subr.mxu0 0.0
    %86 = vmatpush1.msra.mxu0 0.0
    %87 = vmatprep.subr.mxu0 0.0
    %88 = vmatpush1.msra.mxu0 0.0
    %89 = vmatprep.subr.mxu0 0.0
    %90 = vmatpush1.msra.mxu0 0.0
    %91 = vmatprep.subr.mxu0 0.0
    %92 = vmatpush1.msra.mxu0 0.0
    %93 = vmatprep.subr.mxu0 0.0
    %94 = vmatpush1.msra.mxu0 0.0
    %95 = vmatprep.mubr.f32.mxu0 0.0
    %96 = vmatmul.mubr.f32.gmra.mrb[0].mxu0 %v29
    %v97 = vpop.f32.mrb[0].mxu0
    %v98 = vadd.f32 0.0, %v97
    %v99 = vpop.f32.mrb[0].mxu0
    %100 = vdwg.mxu0
    %v101 = vmax.f32 %v98, 0.0
    %v102 = vld [vmem:[#allocation2 + $0x8] sm:$0xff]
    %v103 = vld [vmem:[#allocation2 + $0x10] sm:$0xff]
    %v104 = vld [vmem:[#allocation2 + $0x18] sm:$0xff]
    %v105 = vld [vmem:[#allocation2 + $0x20] sm:$0xff]
    %v106 = vld [vmem:[#allocation2 + $0x28] sm:$0xff]
    %v107 = vld [vmem:[#allocation2 + $0x30] sm:$0xff]
    %v108 = vld [vmem:[#allocation2 + $0x38] sm:$0xff]
    %v109 = vld [vmem:[#allocation2 + $0x40] sm:$0xff]
    %v110 = vld [vmem:[#allocation2 + $0x48] sm:$0xff]
    %v111 = vld [vmem:[#allocation2 + $0x50] sm:$0xff]
    %v112 = vld [vmem:[#allocation2 + $0x58] sm:$0xff]
    %v113 = vld [vmem:[#allocation2 + $0x60] sm:$0xff]
    %v114 = vld [vmem:[#allocation2 + $0x68] sm:$0xff]
    %v115 = vld [vmem:[#allocation2 + $0x70] sm:$0xff]
    %v116 = vld [vmem:[#allocation2 + $0x78] sm:$0xff]
    %v117 = vld [vmem:[#allocation2 + $0x80] sm:$0xff]
    %v118 = vld [vmem:[#allocation2 + $0x88] sm:$0xff]
    %v119 = vlaneseq
    %v120 = vshrl.u32 %v119, 7
    %v121 = vsub.s32 0, %v120
    %v122 = vrot.slane %v118, %v121
    %123 = vmatprep.subr.mxu0 0.0
    %124 = vmatpush1.msra.mxu0 %v102
    %125 = vmatprep.subr.mxu0 0.0
    %126 = vmatpush1.msra.mxu0 %v103
    %127 = vmatprep.subr.mxu0 0.0
    %128 = vmatpush1.msra.mxu0 %v104
    %129 = vmatprep.subr.mxu0 0.0
    %130 = vmatpush1.msra.mxu0 %v105
    %131 = vmatprep.subr.mxu0 0.0
    %132 = vmatpush1.msra.mxu0 %v106
    %133 = vmatprep.subr.mxu0 0.0
    %134 = vmatpush1.msra.mxu0 %v107
    %135 = vmatprep.subr.mxu0 0.0
    %136 = vmatpush1.msra.mxu0 %v108
    %137 = vmatprep.subr.mxu0 0.0
    %138 = vmatpush1.msra.mxu0 %v109
    %139 = vmatprep.subr.mxu0 0.0
    %140 = vmatpush1.msra.mxu0 %v110
    %141 = vmatprep.subr.mxu0 0.0
    %142 = vmatpush1.msra.mxu0 %v111
    %143 = vmatprep.subr.mxu0 0.0
    %144 = vmatpush1.msra.mxu0 %v112
    %145 = vmatprep.subr.mxu0 0.0
    %146 = vmatpush1.msra.mxu0 %v113
    %147 = vmatprep.subr.mxu0 0.0
    %148 = vmatpush1.msra.mxu0 %v114
    %149 = vmatprep.subr.mxu0 0.0
    %150 = vmatpush1.msra.mxu0 %v115
    %151 = vmatprep.subr.mxu0 0.0
    %152 = vmatpush1.msra.mxu0 %v116
    %153 = vmatprep.subr.mxu0 0.0
    %154 = vmatpush1.msra.mxu0 %v117
    %155 = vmatprep.subr.mxu0 0.0
    %156 = vmatpush1.msra.mxu0 0.0
    %157 = vmatprep.subr.mxu0 0.0
    %158 = vmatpush1.msra.mxu0 0.0
    %159 = vmatprep.subr.mxu0 0.0
    %160 = vmatpush1.msra.mxu0 0.0
    %161 = vmatprep.subr.mxu0 0.0
    %162 = vmatpush1.msra.mxu0 0.0
    %163 = vmatprep.subr.mxu0 0.0
    %164 = vmatpush1.msra.mxu0 0.0
    %165 = vmatprep.subr.mxu0 0.0
    %166 = vmatpush1.msra.mxu0 0.0
    %167 = vmatprep.subr.mxu0 0.0
    %168 = vmatpush1.msra.mxu0 0.0
    %169 = vmatprep.subr.mxu0 0.0
    %170 = vmatpush1.msra.mxu0 0.0
    %171 = vmatprep.subr.mxu0 0.0
    %172 = vmatpush1.msra.mxu0 0.0
    %173 = vmatprep.subr.mxu0 0.0
    %174 = vmatpush1.msra.mxu0 0.0
    %175 = vmatprep.subr.mxu0 0.0
    %176 = vmatpush1.msra.mxu0 0.0
    %177 = vmatprep.subr.mxu0 0.0
    %178 = vmatpush1.msra.mxu0 0.0
    %179 = vmatprep.subr.mxu0 0.0
    %180 = vmatpush1.msra.mxu0 0.0
    %181 = vmatprep.subr.mxu0 0.0
    %182 = vmatpush1.msra.mxu0 0.0
    %183 = vmatprep.subr.mxu0 0.0
    %184 = vmatpush1.msra.mxu0 0.0
    %185 = vmatprep.subr.mxu0 0.0
    %186 = vmatpush1.msra.mxu0 0.0
    %187 = vmatprep.mubr.f32.mxu0 0.0
    %188 = vmatmul.mubr.f32.gmra.mrb[0].mxu0 %v101
    %v189 = vpop.f32.mrb[0].mxu0
    %v190 = vadd.f32 %v122, %v189
    %v191 = vpop.f32.mrb[0].mxu0
    %192 = vdwg.mxu0
    %193 = vst [vmem:[%s2] sm:$0xff] %v190
    // Predicated region
    $region14: #{forward.1} parent=1 // pred_check
      _
    $region15: #{forward.1} parent=1 // pred_check_branch
      %195 = sbr.rel (0) target = $region17
    $region16: #{forward.1} parent=1 // pred_region
      _
    $region17: #{forward.1} parent=1 // pred_fallthru
      _
    // Predicated region
    $region18: #{forward.1} parent=1 // pred_check
      _
    $region19: #{forward.1} parent=1 // pred_check_branch
      %197 = sbr.rel (0) target = $region21
    $region20: #{forward.1} parent=1 // pred_region
      _
    $region21: #{forward.1} parent=1 // pred_fallthru
      _
    %198 = vsyncpa [#allocation3], 1

</llo_original>
